<compile_context>
chip_gen: v5e
topology: v5e:2x2
jax: 0.10.0
libtpu: 0.0.40
codegen_flags: <defaults>
</compile_context>

<pallas_src>
import functools
import math

import jax
import jax.numpy as jnp
from jax.experimental import pallas as pl
from jax.experimental.pallas import tpu as pltpu

_LANES = 128
_MiB = 1024 * 1024


def _layernorm_kernel(x_ref, a_ref, b_ref, o_ref, *, eps, features, approx):
    """Standard path: x_ref is (rows_tile, features)."""
    x = x_ref[...].astype(jnp.float32)
    # One-pass statistics: two independent reductions the scheduler can
    # interleave.
    s1 = jnp.sum(x, axis=-1, keepdims=True)
    s2 = jnp.sum(x * x, axis=-1, keepdims=True)
    mean = s1 * (1.0 / features)
    # Unbiased variance (ddof=1), matching torch.Tensor.std() in the module.
    var = jnp.maximum(s2 - s1 * mean, 0.0) * (1.0 / (features - 1))
    inv = pl.reciprocal(jnp.sqrt(var) + eps, approx=approx)
    # a_ref / b_ref are already f32 (cast once in the wrapper, not per step).
    o_ref[...] = ((x - mean) * inv * a_ref[...] + b_ref[...]).astype(o_ref.dtype)


def _layernorm_packed_kernel(x_ref, a_ref, b_ref, bd_ref, o_ref, *,
                             eps, features, approx):
    """Lane-packed path for features < 128 (features divides 128).

    Each physical row packs k = 128 // features logical rows along the lane
    axis so DMA and vector stores stay 128-lane dense.  Segmented statistics
    are one block-diagonal 0/1 matmul per statistic on the (otherwise idle)
    MXU; results arrive already broadcast across each segment, so no masked
    reduce / where-scatter loop and no lane-sparse (R, 1) broadcast.
    Products with a 0/1 matrix are exact; only summation order changes.
    """
    x = x_ref[...].astype(jnp.float32)          # (rows_tile, k*features)
    bd = bd_ref[...]                            # (k*F, k*F) block-diag 0/1, f32
    s1 = jnp.dot(x, bd, preferred_element_type=jnp.float32)
    s2 = jnp.dot(x * x, bd, preferred_element_type=jnp.float32)
    mean = s1 * (1.0 / features)
    var = jnp.maximum(s2 - s1 * mean, 0.0) * (1.0 / (features - 1))
    inv = pl.reciprocal(jnp.sqrt(var) + eps, approx=approx)
    o_ref[...] = ((x - mean) * inv * a_ref[...] + b_ref[...]).astype(o_ref.dtype)


def _vmem_budget():
    """Generation-aware (vmem_limit_bytes, per-tile byte budget, input buffers)."""
    try:
        cap = pltpu.get_tpu_info().vmem_capacity_bytes
    except Exception:
        cap = 64 * _MiB                     # conservative default (v7x-sized)
    if cap >= 100 * _MiB:                   # v5e / v6e: 128 MiB physical VMEM
        # 2 in + 2 out buffers of a 16 MiB tile = 64 MiB, well under the limit.
        return 96 * _MiB, 16 * _MiB, 2
    # v7x (64 MiB physical) or unknown: smaller tiles, 3rd input buffer hides
    # DMA issue gaps at ~3 TB/s per-core HBM.  (3 in + 2 out) * 5 MiB = 25 MiB.
    return 48 * _MiB, 5 * _MiB, 3


def _choose_rows_tile(rows, feats, dtype, tile_budget_bytes):
    """Byte-budget, dtype-aware, sublane-aligned row tile; even tile count."""
    itemsize = jnp.dtype(dtype).itemsize
    sublane = max(8, 32 // itemsize)        # 8 for f32, 16 for bf16
    max_rows = (tile_budget_bytes // (feats * itemsize)) // sublane * sublane
    max_rows = max(sublane, max_rows)
    if rows <= max_rows:
        return rows                         # single full-extent tile
    # Prefer an even number of tiles so both TensorCores of a 2-TC chip (v7x)
    # get equal work under dimension_semantics=("parallel",).
    n = pl.cdiv(rows, max_rows)
    if n % 2:
        n += 1
    tile = pl.cdiv(pl.cdiv(rows, n), sublane) * sublane
    return max(sublane, min(tile, max_rows))


def layer_norm(x, a_2, b_2, eps=1e-6, rows_tile=None, approx_reciprocal=False):
    """x: (..., features). a_2, b_2: (features,). Matches the module forward."""
    orig_shape = x.shape
    features = orig_shape[-1]
    assert features > 1, "unbiased std (ddof=1) requires features > 1"
    rows = math.prod(orig_shape[:-1]) if len(orig_shape) > 1 else 1
    x2 = x.reshape(rows, features)

    vmem_limit, tile_budget, n_buffers = _vmem_budget()

    # Lane packing: for small feature counts that divide 128, pack k logical
    # rows along the lane axis so loads/stores are 128-lane dense (no masked
    # partial vst).  Otherwise fall back to the standard path (correct, and
    # for features >= 128 already lane-dense).
    k = _LANES // features if features < _LANES else 1
    pack = features < _LANES and _LANES % features == 0 and rows % k == 0
    if pack:
        r_eff, f_eff = rows // k, k * features
        x2 = x2.reshape(r_eff, f_eff)
        a_in = jnp.tile(a_2.reshape(1, features).astype(jnp.float32), (1, k))
        b_in = jnp.tile(b_2.reshape(1, features).astype(jnp.float32), (1, k))
        seg = jnp.arange(f_eff) // features
        block_diag = (seg[:, None] == seg[None, :]).astype(jnp.float32)
        kernel = functools.partial(_layernorm_packed_kernel, eps=eps,
                                   features=features, approx=approx_reciprocal)
        extra_inputs = (block_diag,)
        extra_specs = [pl.BlockSpec((f_eff, f_eff), lambda i: (0, 0))]
    else:
        r_eff, f_eff = rows, features
        a_in = a_2.reshape(1, features).astype(jnp.float32)
        b_in = b_2.reshape(1, features).astype(jnp.float32)
        kernel = functools.partial(_layernorm_kernel, eps=eps,
                                   features=features, approx=approx_reciprocal)
        extra_inputs = ()
        extra_specs = []

    if rows_tile is None:
        rows_tile = _choose_rows_tile(r_eff, f_eff, x.dtype, tile_budget)
    rows_tile = min(rows_tile, r_eff)

    # Ragged last block is fine: rows are independent, so the garbage rows of
    # a partial tile never contaminate valid rows and their OOB writes are
    # discarded -> no jnp.pad / slice HBM round-trip.
    n_tiles = pl.cdiv(r_eff, rows_tile)

    def _x_index(i):
        return (i, 0)

    x_spec = pl.BlockSpec((rows_tile, f_eff), _x_index)
    if n_buffers != 2 and n_tiles > n_buffers:
        try:
            x_spec = pl.BlockSpec((rows_tile, f_eff), _x_index,
                                  pipeline_mode=pl.Buffered(n_buffers))
        except TypeError:
            pass  # older jax without pipeline_mode: keep default double-buffer

    # Constant block index -> weights (and the block-diag matrix) stay resident
    # in VMEM across grid steps (no per-step re-DMA).
    w_spec = pl.BlockSpec((1, f_eff), lambda i: (0, 0))

    out = pl.pallas_call(
        kernel,
        out_shape=jax.ShapeDtypeStruct((r_eff, f_eff), x.dtype),
        grid_spec=pltpu.PrefetchScalarGridSpec(
            num_scalar_prefetch=0,
            grid=(n_tiles,),
            in_specs=[x_spec, w_spec, w_spec] + extra_specs,
            out_specs=pl.BlockSpec((rows_tile, f_eff), _x_index),
        ),
        compiler_params=pltpu.CompilerParams(
            dimension_semantics=("parallel",),   # shard row tiles across cores
            vmem_limit_bytes=vmem_limit,         # v5e scoped default (16 MiB) too low
        ),
    )(x2, a_in, b_in, *extra_inputs)

    return out.reshape(orig_shape)


if __name__ == "__main__":
    def ref_layer_norm(x, a_2, b_2, eps):
        mean = jnp.mean(x, axis=-1, keepdims=True)
        std = jnp.std(x, axis=-1, keepdims=True, ddof=1)  # torch .std() is unbiased
        return a_2 * (x - mean) / (std + eps) + b_2

    eps = 1e-6
    key = jax.random.PRNGKey(0)
    k1, k2, k3, k4 = jax.random.split(key, 4)

    # Case 1: module defaults (ones / zeros), hidden=32 -> lane-packed MXU path.
    batch, seq, hidden = 2, 8, 32
    x = jax.random.normal(k1, (batch, seq, hidden), dtype=jnp.float32)
    a_2 = jnp.ones((hidden,), dtype=jnp.float32)
    b_2 = jnp.zeros((hidden,), dtype=jnp.float32)
    out = jax.block_until_ready(layer_norm(x, a_2, b_2, eps=eps))
    assert out.shape == x.shape
    assert jnp.allclose(out, ref_layer_norm(x, a_2, b_2, eps), atol=1e-5, rtol=1e-5)

    # Case 2: non-trivial gain/bias, same packed path (checks a/b lane tiling).
    a_r = 1.0 + 0.1 * jax.random.normal(k2, (hidden,), dtype=jnp.float32)
    b_r = 0.1 * jax.random.normal(k3, (hidden,), dtype=jnp.float32)
    out2 = jax.block_until_ready(layer_norm(x, a_r, b_r, eps=eps))
    assert jnp.allclose(out2, ref_layer_norm(x, a_r, b_r, eps), atol=1e-5, rtol=1e-5)

    # Case 3: hidden >= 128 with a ragged multi-tile grid (rows=21, tile=8):
    # exercises the standard kernel and the no-pad partial last block.
    b3, s3, h3 = 3, 7, 256
    x3 = jax.random.normal(k4, (b3, s3, h3), dtype=jnp.float32)
    a3 = jnp.ones((h3,), dtype=jnp.float32)
    bias3 = jnp.zeros((h3,), dtype=jnp.float32)
    out3 = jax.block_until_ready(layer_norm(x3, a3, bias3, eps=eps, rows_tile=8))
    assert jnp.allclose(out3, ref_layer_norm(x3, a3, bias3, eps), atol=1e-5, rtol=1e-5)

    print("KERNEL_OK")
</pallas_src>

<mosaic_0001>
module attributes {stable_mosaic.version = 11 : i64} {
  func.func @_layernorm_packed_kernel(%arg0: i32, %arg1: memref<4x128xf32, #tpu.memory_space<vmem>>, %arg2: memref<1x128xf32, #tpu.memory_space<vmem>>, %arg3: memref<1x128xf32, #tpu.memory_space<vmem>>, %arg4: memref<128x128xf32, #tpu.memory_space<vmem>>, %arg5: memref<4x128xf32, #tpu.memory_space<vmem>>) attributes {dimension_semantics = [#tpu.dimension_semantics<parallel>], iteration_bounds = array<i64: 1>, scalar_prefetch = 0 : i64, scratch_operands = 0 : i64, tpu.core_type = #tpu.core_type<tc>, window_params = [{transform_indices = @transform_0, window_bounds = array<i64: 4, 128>}, {pipeline_mode = #tpu.pipeline_mode<synchronous>, transform_indices = @transform_1, window_bounds = array<i64: 1, 128>}, {pipeline_mode = #tpu.pipeline_mode<synchronous>, transform_indices = @transform_2, window_bounds = array<i64: 1, 128>}, {pipeline_mode = #tpu.pipeline_mode<synchronous>, transform_indices = @transform_3, window_bounds = array<i64: 128, 128>}, {transform_indices = @transform_4, window_bounds = array<i64: 4, 128>}]} {
    %c0 = arith.constant 0 : index
    %c0_0 = arith.constant 0 : index
    %0 = vector.load %arg1[%c0, %c0_0] : memref<4x128xf32, #tpu.memory_space<vmem>>, vector<4x128xf32>
    %c0_1 = arith.constant 0 : index
    %c0_2 = arith.constant 0 : index
    %1 = vector.load %arg4[%c0_1, %c0_2] : memref<128x128xf32, #tpu.memory_space<vmem>>, vector<128x128xf32>
    %cst = arith.constant dense<0.000000e+00> : vector<4x128xf32>
    %2 = tpu.matmul %0, %1, %cst {dimension_numbers = #tpu.dot_dimension_numbers<[1], [0], [0], [1], [0, 0, 1, 1], [], []>} : vector<4x128xf32>, vector<128x128xf32>, vector<4x128xf32> -> vector<4x128xf32>
    %3 = arith.mulf %0, %0 : vector<4x128xf32>
    %cst_3 = arith.constant dense<0.000000e+00> : vector<4x128xf32>
    %4 = tpu.matmul %3, %1, %cst_3 {dimension_numbers = #tpu.dot_dimension_numbers<[1], [0], [0], [1], [0, 0, 1, 1], [], []>} : vector<4x128xf32>, vector<128x128xf32>, vector<4x128xf32> -> vector<4x128xf32>
    %cst_4 = arith.constant 3.125000e-02 : f32
    %5 = vector.broadcast %cst_4 : f32 to vector<4x128xf32>
    %6 = arith.mulf %2, %5 : vector<4x128xf32>
    %7 = arith.mulf %2, %6 : vector<4x128xf32>
    %8 = arith.subf %4, %7 : vector<4x128xf32>
    %cst_5 = arith.constant 0.000000e+00 : f32
    %9 = vector.broadcast %cst_5 : f32 to vector<4x128xf32>
    %10 = arith.maximumf %8, %9 : vector<4x128xf32>
    %cst_6 = arith.constant 0.0322580636 : f32
    %11 = vector.broadcast %cst_6 : f32 to vector<4x128xf32>
    %12 = arith.mulf %10, %11 : vector<4x128xf32>
    %13 = math.sqrt %12 : vector<4x128xf32>
    %cst_7 = arith.constant 9.99999997E-7 : f32
    %14 = vector.broadcast %cst_7 : f32 to vector<4x128xf32>
    %15 = arith.addf %13, %14 : vector<4x128xf32>
    %16 = tpu.reciprocal %15 : vector<4x128xf32> -> vector<4x128xf32>
    %17 = arith.subf %0, %6 : vector<4x128xf32>
    %18 = arith.mulf %17, %16 : vector<4x128xf32>
    %c0_8 = arith.constant 0 : index
    %c0_9 = arith.constant 0 : index
    %19 = vector.load %arg2[%c0_8, %c0_9] : memref<1x128xf32, #tpu.memory_space<vmem>>, vector<1x128xf32>
    %20 = vector.broadcast %19 : vector<1x128xf32> to vector<4x128xf32>
    %21 = arith.mulf %18, %20 : vector<4x128xf32>
    %c0_10 = arith.constant 0 : index
    %c0_11 = arith.constant 0 : index
    %22 = vector.load %arg3[%c0_10, %c0_11] : memref<1x128xf32, #tpu.memory_space<vmem>>, vector<1x128xf32>
    %23 = vector.broadcast %22 : vector<1x128xf32> to vector<4x128xf32>
    %24 = arith.addf %21, %23 : vector<4x128xf32>
    %c0_12 = arith.constant 0 : index
    %c0_13 = arith.constant 0 : index
    %25 = vector.load %arg5[%c0_12, %c0_13] : memref<4x128xf32, #tpu.memory_space<vmem>>, vector<4x128xf32>
    tpu.vector_store %arg5[%c0_12, %c0_13], %24 {strides = array<i32>} : memref<4x128xf32, #tpu.memory_space<vmem>>, vector<4x128xf32>,
    return
  }
  func.func @transform_0(%arg0: i32) -> (i32, i32) {
    %c0_i32 = arith.constant 0 : i32
    %c0_i32_0 = arith.constant 0 : i32
    return %arg0, %c0_i32 : i32, i32
  }
  func.func @transform_1(%arg0: i32) -> (i32, i32) {
    %c0_i32 = arith.constant 0 : i32
    %c0_i32_0 = arith.constant 0 : i32
    %c0_i32_1 = arith.constant 0 : i32
    return %c0_i32, %c0_i32_0 : i32, i32
  }
  func.func @transform_2(%arg0: i32) -> (i32, i32) {
    %c0_i32 = arith.constant 0 : i32
    %c0_i32_0 = arith.constant 0 : i32
    %c0_i32_1 = arith.constant 0 : i32
    return %c0_i32, %c0_i32_0 : i32, i32
  }
  func.func @transform_3(%arg0: i32) -> (i32, i32) {
    %c0_i32 = arith.constant 0 : i32
    %c0_i32_0 = arith.constant 0 : i32
    %c0_i32_1 = arith.constant 0 : i32
    return %c0_i32, %c0_i32_0 : i32, i32
  }
  func.func @transform_4(%arg0: i32) -> (i32, i32) {
    %c0_i32 = arith.constant 0 : i32
    %c0_i32_0 = arith.constant 0 : i32
    return %arg0, %c0_i32 : i32, i32
  }
}

</mosaic_0001>

<llo_original>
// kernel: tpu_custom_call.1
$region0: #{tpu_custom_call.1}
  #allocation0 [shape = 'u32[]', space=smem, size = 0x4, offset = 0x4, fixed_abs, tag = 'smem constant byte address 0x4 - core index']
  #allocation1 [shape = 'u32[72,128]{1,0:T(1,128)}', space=vmem, size = 0x9000, scoped, tag = 'internal scratch']
  %s0 = inlined_call_operand.hbm [shape: f32[4,128], index: 0, kind: input, shape index: {}]
  %s1 = inlined_call_operand.hbm [shape: f32[1,128], index: 1, kind: input, shape index: {}]
  %s2 = inlined_call_operand.vmem [shape: f32[1,128], index: 2, kind: input, shape index: {}]
  %s3 = inlined_call_operand.hbm [shape: f32[128,128], index: 3, kind: input, shape index: {}]
  %s4 = inlined_call_operand.hbm [shape: f32[4,128], index: 4, kind: output, shape index: {}]
  %s5 = sld [smem:[#allocation0]]
  $region38: #{tpu_custom_call.1} parent=0
    _
  %s7 = ssub.s32 1, %s5
  %s8 = scalar_select 0, %s7, %s5
  $region1: #{tpu_custom_call.1} parent=0
    #allocation2 [shape = 'u8[2048]{0}', space=vmem, size = 0x800, scoped, tag = 'input window, operand 0, single buffered']
    #allocation3 [shape = 's32[1]{0}', space=sflag, size = 0x4, scoped, tag = 'scoped memory for tpu_custom_call.1']
    #allocation4 [shape = 's32[1]{0}', space=sflag, size = 0x4, scoped, tag = 'scoped memory for tpu_custom_call.1']
    #allocation5 [shape = 'u8[512]{0}', space=vmem, size = 0x400, scoped, tag = 'input window, operand 1, single buffered']
    #allocation6 [shape = 's32[1]{0}', space=sflag, size = 0x4, scoped, tag = 'scoped memory for tpu_custom_call.1']
    #allocation7 [shape = 'u8[65536]{0}', space=vmem, size = 0x10000, scoped, tag = 'input window, operand 3, single buffered']
    #allocation8 [shape = 'u8[2048]{0}', space=vmem, size = 0x800, scoped, tag = 'output window, operand 0, single buffered']
    %9 = vsyncpa [#allocation3], 0
    %10 = vsyncpa [#allocation6], 0
    %11 = vsyncpa [#allocation4], 0
    // Predicated region
    $region2: #{tpu_custom_call.1} parent=1 // pred_check
      _
    $region3: #{tpu_custom_call.1} parent=1 // pred_check_branch
      %13 = sbr.rel (0) target = $region5
    $region4: #{tpu_custom_call.1} parent=1 // pred_region
      %15 = vsyncadd [#allocation3], 0
      %s17 = sshll.u32 %s0, 4
      %s18 = int_to_ptr.hbm [resolvable:$true] %s17
      %s19 = sshll.u32 [#allocation2], 4
      %s20 = int_to_ptr.vmem [resolvable:$true] %s19
      %22 = dma.hbm_to_vmem [thread:$0]  %s18, 64, %s20, [#allocation3]
    $region5: #{tpu_custom_call.1} parent=1 // pred_fallthru
      _
    // Predicated region
    $region6: #{tpu_custom_call.1} parent=1 // pred_check
      _
    $region7: #{tpu_custom_call.1} parent=1 // pred_check_branch
      %24 = sbr.rel (0) target = $region9
    $region8: #{tpu_custom_call.1} parent=1 // pred_region
      %26 = vsyncadd [#allocation6], 0
      %s28 = sshll.u32 %s1, 4
      %s29 = int_to_ptr.hbm [resolvable:$true] %s28
      %s30 = sshll.u32 [#allocation5], 4
      %s31 = int_to_ptr.vmem [resolvable:$true] %s30
      %33 = dma.hbm_to_vmem [thread:$0]  %s29, 16, %s31, [#allocation6]
    $region9: #{tpu_custom_call.1} parent=1 // pred_fallthru
      _
    // Predicated region
    $region10: #{tpu_custom_call.1} parent=1 // pred_check
      _
    $region11: #{tpu_custom_call.1} parent=1 // pred_check_branch
      %35 = sbr.rel (0) target = $region13
    $region12: #{tpu_custom_call.1} parent=1 // pred_region
      _
    $region13: #{tpu_custom_call.1} parent=1 // pred_fallthru
      _
    // Predicated region
    $region14: #{tpu_custom_call.1} parent=1 // pred_check
      _
    $region15: #{tpu_custom_call.1} parent=1 // pred_check_branch
      %37 = sbr.rel (0) target = $region17
    $region16: #{tpu_custom_call.1} parent=1 // pred_region
      %39 = vsyncadd [#allocation6], 0
      %s40 = sshll.u32 %s3, 4
      %s41 = int_to_ptr.hbm [resolvable:$true] %s40
      %s42 = sshll.u32 [#allocation7], 4
      %s43 = int_to_ptr.vmem [resolvable:$true] %s42
      %48 = dma.hbm_to_vmem [thread:$0]  %s41, 2048, %s43, [#allocation6], 128, 128, 8
    $region17: #{tpu_custom_call.1} parent=1 // pred_fallthru
      _
    // Predicated region
    $region18: #{tpu_custom_call.1} parent=1 // pred_check
      _
    $region19: #{tpu_custom_call.1} parent=1 // pred_check_branch
      %50 = sbr.rel (0) target = $region21
    $region20: #{tpu_custom_call.1} parent=1 // pred_region
      %52 = dma.done [#allocation3], 64
    $region21: #{tpu_custom_call.1} parent=1 // pred_fallthru
      _
    // Predicated region
    $region22: #{tpu_custom_call.1} parent=1 // pred_check
      _
    $region23: #{tpu_custom_call.1} parent=1 // pred_check_branch
      %54 = sbr.rel (0) target = $region25
    $region24: #{tpu_custom_call.1} parent=1 // pred_region
      %56 = dma.done [#allocation6], 16
    $region25: #{tpu_custom_call.1} parent=1 // pred_fallthru
      _
    // Predicated region
    $region26: #{tpu_custom_call.1} parent=1 // pred_check
      _
    $region27: #{tpu_custom_call.1} parent=1 // pred_check_branch
      %58 = sbr.rel (0) target = $region29
    $region28: #{tpu_custom_call.1} parent=1 // pred_region
      %60 = dma.done [#allocation6], 2048
    $region29: #{tpu_custom_call.1} parent=1 // pred_fallthru
      _
    %v61 = vld [vmem:[#allocation2] sm:$0xf]
    %v62 = vld [vmem:[#allocation7] sm:$0xff]
    %v63 = vld [vmem:[#allocation7 + $0x8] sm:$0xff]
    %v64 = vld [vmem:[#allocation7 + $0x10] sm:$0xff]
    %v65 = vld [vmem:[#allocation7 + $0x18] sm:$0xff]
    %v66 = vld [vmem:[#allocation7 + $0x20] sm:$0xff]
    %v67 = vld [vmem:[#allocation7 + $0x28] sm:$0xff]
    %v68 = vld [vmem:[#allocation7 + $0x30] sm:$0xff]
    %v69 = vld [vmem:[#allocation7 + $0x38] sm:$0xff]
    %v70 = vld [vmem:[#allocation7 + $0x40] sm:$0xff]
    %v71 = vld [vmem:[#allocation7 + $0x48] sm:$0xff]
    %v72 = vld [vmem:[#allocation7 + $0x50] sm:$0xff]
    %v73 = vld [vmem:[#allocation7 + $0x58] sm:$0xff]
    %v74 = vld [vmem:[#allocation7 + $0x60] sm:$0xff]
    %v75 = vld [vmem:[#allocation7 + $0x68] sm:$0xff]
    %v76 = vld [vmem:[#allocation7 + $0x70] sm:$0xff]
    %v77 = vld [vmem:[#allocation7 + $0x78] sm:$0xff]
    %78 = vmatpush.msra.mxu0 %v77
    %79 = vmatpush.msra.mxu0 %v76
    %80 = vmatpush.msra.mxu0 %v75
    %81 = vmatpush.msra.mxu0 %v74
    %82 = vmatpush.msra.mxu0 %v73
    %83 = vmatpush.msra.mxu0 %v72
    %84 = vmatpush.msra.mxu0 %v71
    %85 = vmatpush.msra.mxu0 %v70
    %86 = vmatpush.msra.mxu0 %v69
    %87 = vmatpush.msra.mxu0 %v68
    %88 = vmatpush.msra.mxu0 %v67
    %89 = vmatpush.msra.mxu0 %v66
    %90 = vmatpush.msra.mxu0 %v65
    %91 = vmatpush.msra.mxu0 %v64
    %92 = vmatpush.msra.mxu0 %v63
    %93 = vmatpush.msra.mxu0 %v62
    %94 = vmatmul.f32.gmra.mxu0 %v61
    %v95 = vpop.f32.mrf.mxu0
    %v96 = vadd.f32 0.0, %v95
    %97 = vdwg.mxu0
    %v98 = vmul.f32 %v61, %v61
    %99 = vmatpush.msra.mxu0 %v77
    %100 = vmatpush.msra.mxu0 %v76
    %101 = vmatpush.msra.mxu0 %v75
    %102 = vmatpush.msra.mxu0 %v74
    %103 = vmatpush.msra.mxu0 %v73
    %104 = vmatpush.msra.mxu0 %v72
    %105 = vmatpush.msra.mxu0 %v71
    %106 = vmatpush.msra.mxu0 %v70
    %107 = vmatpush.msra.mxu0 %v69
    %108 = vmatpush.msra.mxu0 %v68
    %109 = vmatpush.msra.mxu0 %v67
    %110 = vmatpush.msra.mxu0 %v66
    %111 = vmatpush.msra.mxu0 %v65
    %112 = vmatpush.msra.mxu0 %v64
    %113 = vmatpush.msra.mxu0 %v63
    %114 = vmatpush.msra.mxu0 %v62
    %115 = vmatmul.f32.gmra.mxu0 %v98
    %v116 = vpop.f32.mrf.mxu0
    %v117 = vadd.f32 0.0, %v116
    %118 = vdwg.mxu0
    %v119 = vmul.f32 %v96, 0.03125
    %v120 = vmul.f32 %v96, %v119
    %v121 = vsub.f32 %v117, %v120
    %v122 = vmax.f32 %v121, 0.0
    %v123 = vmul.f32 %v122, 0.032258064
    %v124 = vrsqrt.pop %v123
    %v125 = vmul.f32 %v124, %v123
    %v126 = vmul.f32 %v125, %v124
    %v127 = vmul.f32 0.5, %v126
    %v128 = vsub.f32 1.5, %v127
    %v129 = vmul.f32 %v124, %v128
    %v130 = vmul.f32 %v123, %v129
    %vm131 = vcmp.eq.f32.partialorder %v123, inf
    %v132 = vsel %vm131, %v123, %v130
    %vm133 = vcmp.eq.f32.partialorder %v123, 0.0
    %v134 = vand.u32 %v123, 2147483648
    %v135 = vsel %vm133, %v134, %v132
    %v136 = vadd.f32 %v135, 1e-06
    %v137 = vrcp.pop %v136
    %v138 = vmul.f32 %v136, %v137
    %v139 = vsub.f32 1.0, %v138
    %v140 = vmul.f32 %v137, %v139
    %v141 = vadd.f32 %v137, %v140
    %vm142 = vweird.f32 %v136
    %vm143 = vweird.f32 %v137
    %vm144 = vmor %vm142, %vm143
    %v145 = vsel %vm144, %v137, %v141
    %v146 = vand.u32 2147483647, %v136
    %vm147 = vcmp.eq.f32.partialorder %v146, 8.507059e+37
    %v148 = vand.u32 %v136, 2147483648
    %v149 = vor.u32 1.1754944e-38, %v148
    %v150 = vsel %vm147, %v149, %v145
    %v151 = vsub.f32 %v61, %v119
    %v152 = vmul.f32 %v151, %v150
    %v153 = vld [vmem:[#allocation5] sm:$0x1]
    %v155 = vperm.slane %v153, 0
    %v157 = vmul.f32 %v152, %v155
    %v158 = vld [vmem:[%s2] sm:$0x1]
    %v160 = vperm.slane %v158, 0
    %v162 = vadd.f32 %v157, %v160
    %163 = vst [vmem:[#allocation8] sm:$0xf] %v162
    // Predicated region
    $region30: #{tpu_custom_call.1} parent=1 // pred_check
      _
    $region31: #{tpu_custom_call.1} parent=1 // pred_check_branch
      %165 = sbr.rel (0) target = $region33
    $region32: #{tpu_custom_call.1} parent=1 // pred_region
      %167 = vsyncadd [#allocation4], 0
      %s169 = sshll.u32 [#allocation8], 4
      %s170 = int_to_ptr.vmem [resolvable:$true] %s169
      %s171 = sshll.u32 %s4, 4
      %s172 = int_to_ptr.hbm [resolvable:$true] %s171
      %174 = dma.vmem_to_hbm [thread:$0]  %s170, 64, %s172, [#allocation4]
    $region33: #{tpu_custom_call.1} parent=1 // pred_fallthru
      _
    // Predicated region
    $region34: #{tpu_custom_call.1} parent=1 // pred_check
      _
    $region35: #{tpu_custom_call.1} parent=1 // pred_check_branch
      %176 = sbr.rel (0) target = $region37
    $region36: #{tpu_custom_call.1} parent=1 // pred_region
      %178 = dma.done [#allocation4], 64
    $region37: #{tpu_custom_call.1} parent=1 // pred_fallthru
      _
    %179 = vsyncpa [#allocation3], 1
    %180 = vsyncpa [#allocation6], 1
    %181 = vsyncpa [#allocation4], 1

</llo_original>
